<compile_context>
chip_gen: v6e
topology: v6e:2x2x1
jax: 0.10.0
libtpu: 0.0.40
codegen_flags: <defaults>
</compile_context>

<pallas_src>
import functools

import jax
import jax.numpy as jnp
from jax.experimental import pallas as pl
from jax.experimental.pallas import tpu as pltpu


def _round_up(x, m):
    return ((x + m - 1) // m) * m


def _cdiv(a, b):
    return (a + b - 1) // b


def _vmem_limit_bytes():
    """Scoped-VMEM limit derived from the generation (v5e/v6e 128 MiB,
    v7x 64 MiB physical); conservative fallback if the query is unavailable."""
    cap = 64 * 1024 * 1024
    try:
        info = pltpu.get_tpu_info()
        cap = int(getattr(info, "vmem_capacity_bytes", cap) or cap)
    except Exception:
        pass
    return max(32 * 1024 * 1024, min(cap * 3 // 4, 100 * 1024 * 1024))


def _choose_rows(m, max_row_tile, row_align, min_blocks=1):
    """Row (sublane) tiling: multiples of 8/16 only -> minimal padding waste.

    Returns (row_tile, m_padded) with row_tile % row_align == 0 and
    row_tile * n_blocks == m_padded >= m.  min_blocks=2 keeps both v7x
    TensorCores busy for problems that would otherwise collapse to one block.
    """
    max_rt = max(_round_up(max_row_tile, row_align), row_align)
    n_blocks = max(_cdiv(m, max_rt), min_blocks)
    if m <= row_align:
        n_blocks = 1
    row_tile = _round_up(_cdiv(m, n_blocks), row_align)
    return row_tile, row_tile * n_blocks


def _pick_tile(total, max_tile):
    """Largest 256- (v6e/v7x MXU width) or 128-aligned tile <= max_tile that
    divides `total` (a multiple of 128)."""
    align = 256 if (total % 256 == 0 and max_tile >= 256) else 128
    t = max((min(total, max_tile) // align) * align, align)
    while total % t:
        t -= align
    return t


def _linear_resident_kernel(x_ref, w_ref, b_ref, o_ref, *, op_dtype):
    """Weight-resident fast path: whole (padded) W + bias live in VMEM and the
    grid walks row tiles only.  x is cast in-register (free VALU slot);
    accumulation and bias add are f32."""
    x = x_ref[...]
    if op_dtype is not None:
        x = x.astype(op_dtype)
    acc = jnp.dot(x, w_ref[...], preferred_element_type=jnp.float32)
    o_ref[...] = (acc + b_ref[...]).astype(o_ref.dtype)


def _linear_ktiled_kernel(x_ref, w_ref, b_ref, o_ref, *maybe_acc, op_dtype):
    """Streaming fallback for weights too large to keep resident: K is grid
    axis 2.  For f32 outputs we accumulate straight into the k-invariant
    (VMEM-resident) output block; narrower outputs use an f32 scratch."""
    acc_ref = maybe_acc[0] if maybe_acc else o_ref
    k = pl.program_id(2)

    @pl.when(k == 0)
    def _():
        # Initialize the accumulator with the bias -> no separate finalize add.
        acc_ref[...] = jnp.broadcast_to(b_ref[...], acc_ref.shape)

    x = x_ref[...]
    if op_dtype is not None:
        x = x.astype(op_dtype)
    acc_ref[...] += jnp.dot(x, w_ref[...], preferred_element_type=jnp.float32)

    if maybe_acc:
        @pl.when(k == pl.num_programs(2) - 1)
        def _():
            o_ref[...] = acc_ref[...].astype(o_ref.dtype)


def sequence_wise_linear(x, weight, bias, *, operand_dtype=jnp.bfloat16,
                         max_row_tile=1024, max_col_tile=512, max_k_tile=512,
                         force_k_tiled=False):
    """SequenceWise(nn.Linear) forward:  (T, N, H_in) -> (T, N, H_out).

    x:      (T, N, H_in)
    weight: (H_in, H_out)  (already transposed vs torch's (out, in) layout)
    bias:   (H_out,)
    operand_dtype: matmul operand dtype (default bf16, MXU-native).  Pass None
      to keep the input dtype for a full-precision (slower) matmul.
    """
    t, n, h_in = x.shape
    h_in_w, h_out = weight.shape
    assert h_in == h_in_w, "weight fan-in must match x feature dim"
    m = t * n
    out_dtype = x.dtype
    op_dtype = operand_dtype

    # Glue (view ops in PyTorch): collapse (T, N, H) -> (T*N, H).
    x2d = x.reshape(m, h_in)
    # Weight/bias are tiny: cast/pad them in the wrapper.  x is only ever cast
    # *inside* the kernel, so no extra HBM pass is spent on it.
    w2d = weight if op_dtype is None else weight.astype(op_dtype)
    b2d = bias.astype(jnp.float32).reshape(1, h_out)

    x_bytes = jnp.dtype(x2d.dtype).itemsize
    w_bytes = jnp.dtype(w2d.dtype).itemsize
    o_bytes = jnp.dtype(out_dtype).itemsize
    row_align = max(8, 32 // min(x_bytes, o_bytes))   # f32: 8, bf16: 16

    # Lane-dense feature padding (128 multiples).  W/bias/out are always padded
    # (cheap); x is padded only when H_in itself is misaligned.
    h_in_p = _round_up(h_in, 128)
    h_out_p = _round_up(h_out, 128)

    vmem_limit = _vmem_limit_bytes()
    budget = (vmem_limit * 3) // 5            # headroom for compiler scratch

    # ---------------- Fast path: weight-resident, 1-D row grid --------------
    def fast_bytes(rt):                       # double-buffered working set
        return (2 * rt * h_in_p * x_bytes + 2 * h_in_p * h_out_p * w_bytes
                + 2 * rt * h_out_p * o_bytes + 2 * h_out_p * 4)

    rt_cap = max(_round_up(max_row_tile, row_align), row_align)
    while rt_cap > row_align and fast_bytes(rt_cap) > budget:
        rt_cap = max(_round_up(rt_cap // 2, row_align), row_align)
    use_fast = (not force_k_tiled) and fast_bytes(rt_cap) <= budget

    if use_fast:
        # >=2 row blocks when possible so both v7x TensorCores get work.
        row_tile, m_pad = _choose_rows(m, rt_cap, row_align, min_blocks=2)

        if m_pad != m or h_in_p != h_in:
            # TODO(synk): drop this remaining wrapper pad over x (ragged rows /
            # odd H_in) via masked stores or allow_input_fusion once verified.
            x_in = jnp.pad(x2d, ((0, m_pad - m), (0, h_in_p - h_in)))
        else:
            x_in = x2d
        w_in = jnp.pad(w2d, ((0, h_in_p - h_in), (0, h_out_p - h_out)))
        b_in = jnp.pad(b2d, ((0, 0), (0, h_out_p - h_out)))

        cost = pl.CostEstimate(
            flops=2 * m_pad * h_in_p * h_out_p,
            transcendentals=0,
            bytes_accessed=(m_pad * h_in_p * x_bytes          # x once
                            + h_in_p * h_out_p * w_bytes      # W once (resident)
                            + h_out_p * 4
                            + m_pad * h_out_p * o_bytes))

        out_p = pl.pallas_call(
            functools.partial(_linear_resident_kernel, op_dtype=op_dtype),
            out_shape=jax.ShapeDtypeStruct((m_pad, h_out_p), out_dtype),
            grid_spec=pltpu.PrefetchScalarGridSpec(
                num_scalar_prefetch=0,
                grid=(m_pad // row_tile,),
                in_specs=[
                    pl.BlockSpec((row_tile, h_in_p), lambda i: (i, 0)),   # x tile
                    # Constant block index -> fetched once and held in VMEM.
                    pl.BlockSpec((h_in_p, h_out_p), lambda i: (0, 0)),    # W
                    pl.BlockSpec((1, h_out_p), lambda i: (0, 0)),         # bias
                ],
                out_specs=pl.BlockSpec((row_tile, h_out_p), lambda i: (i, 0)),
            ),
            compiler_params=pltpu.CompilerParams(
                dimension_semantics=("parallel",),
                vmem_limit_bytes=vmem_limit),
            cost_estimate=cost,
        )(x_in, w_in, b_in)
        return out_p[:m, :h_out].reshape(t, n, h_out)

    # ------------- Fallback: K-streamed accumulation (huge weights) ---------
    row_tile, m_pad = _choose_rows(m, min(max_row_tile, 512), row_align)
    col_tile = _pick_tile(h_out_p, max_col_tile)
    k_tile = _pick_tile(h_in_p, max_k_tile)

    x_in = (jnp.pad(x2d, ((0, m_pad - m), (0, h_in_p - h_in)))
            if (m_pad != m or h_in_p != h_in) else x2d)
    w_in = jnp.pad(w2d, ((0, h_in_p - h_in), (0, h_out_p - h_out)))
    b_in = jnp.pad(b2d, ((0, 0), (0, h_out_p - h_out)))

    grid = (m_pad // row_tile, h_out_p // col_tile, h_in_p // k_tile)
    direct_f32 = jnp.dtype(out_dtype) == jnp.dtype(jnp.float32)
    scratch = [] if direct_f32 else [pltpu.VMEM((row_tile, col_tile), jnp.float32)]

    cost = pl.CostEstimate(
        flops=2 * m_pad * h_in_p * h_out_p,
        transcendentals=0,
        bytes_accessed=(grid[1] * m_pad * h_in_p * x_bytes       # x per col block
                        + grid[0] * h_in_p * h_out_p * w_bytes   # W per row block
                        + h_out_p * 4
                        + m_pad * h_out_p * o_bytes))

    out_p = pl.pallas_call(
        functools.partial(_linear_ktiled_kernel, op_dtype=op_dtype),
        out_shape=jax.ShapeDtypeStruct((m_pad, h_out_p), out_dtype),
        grid_spec=pltpu.PrefetchScalarGridSpec(
            num_scalar_prefetch=0,
            grid=grid,
            in_specs=[
                pl.BlockSpec((row_tile, k_tile), lambda i, j, k: (i, k)),   # x
                pl.BlockSpec((k_tile, col_tile), lambda i, j, k: (k, j)),   # W
                pl.BlockSpec((1, col_tile), lambda i, j, k: (0, j)),        # b
            ],
            out_specs=pl.BlockSpec((row_tile, col_tile), lambda i, j, k: (i, j)),
            scratch_shapes=scratch,
        ),
        compiler_params=pltpu.CompilerParams(
            dimension_semantics=("parallel", "parallel", "arbitrary"),
            vmem_limit_bytes=vmem_limit),
        cost_estimate=cost,
    )(x_in, w_in, b_in)
    return out_p[:m, :h_out].reshape(t, n, h_out)


if __name__ == "__main__":
    key = jax.random.PRNGKey(0)
    kx, kw, kb, kx2, kw2, kb2 = jax.random.split(key, 6)

    # Canonical small SequenceWise(nn.Linear) shapes: T=8, N=2, hidden=32.
    T, N, H_IN, H_OUT = 8, 2, 32, 32
    x = jax.random.normal(kx, (T, N, H_IN), dtype=jnp.float32)
    bound = 1.0 / (H_IN ** 0.5)
    weight = jax.random.uniform(kw, (H_IN, H_OUT), minval=-bound, maxval=bound,
                                dtype=jnp.float32)
    bias = jax.random.uniform(kb, (H_OUT,), minval=-bound, maxval=bound,
                              dtype=jnp.float32)

    ref = (x.reshape(T * N, H_IN) @ weight + bias).reshape(T, N, H_OUT)

    # 1) Fast path, default bf16 operands (f32 accumulate) -> bf16 tolerance.
    out = jax.block_until_ready(sequence_wise_linear(x, weight, bias))
    assert out.shape == (T, N, H_OUT)
    assert jnp.allclose(out, ref, atol=5e-2, rtol=5e-2), "fast path (bf16) mismatch"

    # 2) Fast path, full-precision operands.
    out_f32 = jax.block_until_ready(
        sequence_wise_linear(x, weight, bias, operand_dtype=None))
    assert jnp.allclose(out_f32, ref, atol=5e-2, rtol=5e-2), "fast path (f32) mismatch"

    # 3) Ragged rows / misaligned features (m=700 -> padded to 704, H_in=200).
    T2, N2, H2_IN, H2_OUT = 100, 7, 200, 96
    x2 = jax.random.normal(kx2, (T2, N2, H2_IN), dtype=jnp.float32)
    bound2 = 1.0 / (H2_IN ** 0.5)
    w2 = jax.random.uniform(kw2, (H2_IN, H2_OUT), minval=-bound2, maxval=bound2,
                            dtype=jnp.float32)
    b2 = jax.random.uniform(kb2, (H2_OUT,), minval=-bound2, maxval=bound2,
                            dtype=jnp.float32)
    ref2 = (x2.reshape(T2 * N2, H2_IN) @ w2 + b2).reshape(T2, N2, H2_OUT)

    out2 = jax.block_until_ready(sequence_wise_linear(x2, w2, b2))
    assert out2.shape == (T2, N2, H2_OUT)
    assert jnp.allclose(out2, ref2, atol=5e-2, rtol=5e-2), "padded fast path mismatch"

    # 4) Force the K-streamed fallback (exercises direct f32-out accumulation).
    out3 = jax.block_until_ready(
        sequence_wise_linear(x2, w2, b2, force_k_tiled=True,
                             max_row_tile=256, max_col_tile=128, max_k_tile=128))
    assert out3.shape == (T2, N2, H2_OUT)
    assert jnp.allclose(out3, ref2, atol=5e-2, rtol=5e-2), "k-tiled fallback mismatch"

    print("KERNEL_OK")
</pallas_src>

<mosaic_0001>
module attributes {stable_mosaic.version = 11 : i64} {
  func.func @_linear_resident_kernel(%arg0: i32, %arg1: memref<8x128xf32, #tpu.memory_space<vmem>>, %arg2: memref<128x128xbf16, #tpu.memory_space<vmem>>, %arg3: memref<1x128xf32, #tpu.memory_space<vmem>>, %arg4: memref<8x128xf32, #tpu.memory_space<vmem>>) attributes {dimension_semantics = [#tpu.dimension_semantics<parallel>], iteration_bounds = array<i64: 2>, scalar_prefetch = 0 : i64, scratch_operands = 0 : i64, tpu.core_type = #tpu.core_type<tc>, window_params = [{transform_indices = @transform_0, window_bounds = array<i64: 8, 128>}, {pipeline_mode = #tpu.pipeline_mode<synchronous>, transform_indices = @transform_1, window_bounds = array<i64: 128, 128>}, {pipeline_mode = #tpu.pipeline_mode<synchronous>, transform_indices = @transform_2, window_bounds = array<i64: 1, 128>}, {transform_indices = @transform_3, window_bounds = array<i64: 8, 128>}]} {
    %c0 = arith.constant 0 : index
    %c0_0 = arith.constant 0 : index
    %0 = vector.load %arg1[%c0, %c0_0] : memref<8x128xf32, #tpu.memory_space<vmem>>, vector<8x128xf32>
    %1 = arith.truncf %0 : vector<8x128xf32> to vector<8x128xbf16>
    %c0_1 = arith.constant 0 : index
    %c0_2 = arith.constant 0 : index
    %2 = vector.load %arg2[%c0_1, %c0_2] : memref<128x128xbf16, #tpu.memory_space<vmem>>, vector<128x128xbf16>
    %cst = arith.constant dense<0.000000e+00> : vector<8x128xf32>
    %3 = tpu.matmul %1, %2, %cst {dimension_numbers = #tpu.dot_dimension_numbers<[1], [0], [0], [1], [0, 0, 1, 1], [], []>} : vector<8x128xbf16>, vector<128x128xbf16>, vector<8x128xf32> -> vector<8x128xf32>
    %c0_3 = arith.constant 0 : index
    %c0_4 = arith.constant 0 : index
    %4 = vector.load %arg3[%c0_3, %c0_4] : memref<1x128xf32, #tpu.memory_space<vmem>>, vector<1x128xf32>
    %5 = vector.broadcast %4 : vector<1x128xf32> to vector<8x128xf32>
    %6 = arith.addf %3, %5 : vector<8x128xf32>
    %c0_5 = arith.constant 0 : index
    %c0_6 = arith.constant 0 : index
    %7 = vector.load %arg4[%c0_5, %c0_6] : memref<8x128xf32, #tpu.memory_space<vmem>>, vector<8x128xf32>
    tpu.vector_store %arg4[%c0_5, %c0_6], %6 {strides = array<i32>} : memref<8x128xf32, #tpu.memory_space<vmem>>, vector<8x128xf32>,
    return
  }
  func.func @transform_0(%arg0: i32) -> (i32, i32) {
    %c0_i32 = arith.constant 0 : i32
    %c0_i32_0 = arith.constant 0 : i32
    return %arg0, %c0_i32 : i32, i32
  }
  func.func @transform_1(%arg0: i32) -> (i32, i32) {
    %c0_i32 = arith.constant 0 : i32
    %c0_i32_0 = arith.constant 0 : i32
    %c0_i32_1 = arith.constant 0 : i32
    return %c0_i32, %c0_i32_0 : i32, i32
  }
  func.func @transform_2(%arg0: i32) -> (i32, i32) {
    %c0_i32 = arith.constant 0 : i32
    %c0_i32_0 = arith.constant 0 : i32
    %c0_i32_1 = arith.constant 0 : i32
    return %c0_i32, %c0_i32_0 : i32, i32
  }
  func.func @transform_3(%arg0: i32) -> (i32, i32) {
    %c0_i32 = arith.constant 0 : i32
    %c0_i32_0 = arith.constant 0 : i32
    return %arg0, %c0_i32 : i32, i32
  }
}

</mosaic_0001>

<llo_original>
// kernel: tpu_custom_call.1
$region0: #{tpu_custom_call.1}
  #allocation0 [shape = 'u32[]', space=smem, size = 0x4, offset = 0x4, fixed_abs, tag = 'smem constant byte address 0x4 - core index']
  #allocation1 [shape = 'u32[144,128]{1,0:T(1,128)}', space=vmem, size = 0x12000, scoped, tag = 'internal scratch']
  %s0 = inlined_call_operand.hbm [shape: f32[16,128], index: 0, kind: input, shape index: {}]
  %s1 = inlined_call_operand.hbm [shape: bf16[128,128], index: 1, kind: input, shape index: {}]
  %s2 = inlined_call_operand.vmem [shape: f32[1,128], index: 2, kind: input, shape index: {}]
  %s3 = inlined_call_operand.hbm [shape: f32[16,128], index: 3, kind: output, shape index: {}]
  %s4 = sld [smem:[#allocation0]]
  $region53: #{tpu_custom_call.1} parent=0
    _
  %s6 = ssub.s32 1, %s4
  %s7 = scalar_select 0, %s6, %s4
  $region1: #{tpu_custom_call.1} parent=0
    #allocation2 [shape = 'u8[8192]{0}', space=vmem, size = 0x2000, scoped, tag = 'input window, operand 0']
    #allocation3 [shape = 's32[2]{0}', space=sflag, size = 0x8, scoped, tag = 'scoped memory for tpu_custom_call.1']
    #allocation4 [shape = 's32[2]{0}', space=sflag, size = 0x8, scoped, tag = 'scoped memory for tpu_custom_call.1']
    #allocation5 [shape = 'u8[32768]{0}', space=vmem, size = 0x8000, scoped, tag = 'input window, operand 1, single buffered']
    #allocation6 [shape = 's32[1]{0}', space=sflag, size = 0x4, scoped, tag = 'scoped memory for tpu_custom_call.1']
    #allocation7 [shape = 'u8[8192]{0}', space=vmem, size = 0x2000, scoped, tag = 'output window, operand 0']
    %8 = vsyncpa [#allocation3], 0
    %s9 = scalar_lea.sflag [#allocation3], 1
    %10 = vsyncpa %s9, 0
    %11 = vsyncpa [#allocation6], 0
    %12 = vsyncpa [#allocation4], 0
    %s13 = scalar_lea.sflag [#allocation4], 1
    %14 = vsyncpa %s13, 0
    loop: start=0, step=1, limit=4
    $region2: #{tpu_custom_call.1} parent=1 // loop_pre_header
      _
    $region3: #{tpu_custom_call.1} parent=1 // loop_header
      %s16 = sphi 0, %s20
      %p17 = scmp.ge.s32.totalorder %s16, 4
      %s26 = sphi 0, %s28
      %s29 = sphi 0, %s26
      %s30 = sphi 0, %s29
      %s46 = sphi 0, %s30
      %s50 = sphi 0, %s50
      %s52 = sphi 0, %s50
      %s53 = sphi 0, %s52
      %s67 = sphi 0, %s53
      %s71 = sphi 0, %s71
      %s73 = sphi 0, %s71
      %s74 = sphi 0, %s73
      %s88 = sphi 0, %s74
      %s94 = sphi 0, %s96
      %s97 = sphi 0, %s94
      %s98 = sphi 0, %s97
      %s114 = sphi 0, %s98
    $region4: #{tpu_custom_call.1} parent=1 // loop_header_branch
      %19 = sbr.rel (%p17) target = $region8
    $region5: #{tpu_custom_call.1} parent=1 // loop_body
      %s21 = ssub.s32 %s16, 1
      %s22 = ssub.s32 %s16, 2
      %s23 = sadd.s32 %s16, 1
      %s24 = ssub.s32 %s16, %s23
      %p25 = scmp.eq.s32.totalorder %s24, 0
      %s27 = sadd.s32 %s26, 1
      %s28 = scalar_select %p25, %s26, %s27
      %p31 = pneg %p25
      %p32 = scmp.eq.s32.totalorder %s16, 1
      %p33 = por %p31, %p32
      %p34 = scmp.ne.s32.totalorder %s26, %s29
      %p35 = scmp.eq.s32.totalorder %s16, 0
      %p36 = por %p34, %p35
      %p37 = scmp.ne.s32.totalorder %s26, %s29
      %p38 = scmp.eq.s32.totalorder %s21, 1
      %p39 = por %p37, %p38
      %p40 = scmp.ne.s32.totalorder %s29, %s30
      %p41 = scmp.eq.s32.totalorder %s21, 0
      %p42 = por %p40, %p41
      %p43 = scmp.ne.s32.totalorder %s29, %s30
      %p44 = scmp.eq.s32.totalorder %s22, 1
      %p45 = por %p43, %p44
      %p47 = scmp.ne.s32.totalorder %s30, %s46
      %p48 = scmp.eq.s32.totalorder %s22, 0
      %p49 = por %p47, %p48
      %s51 = sadd.s32 %s50, 1
      %p54 = scmp.eq.s32.totalorder %s16, 1
      %p55 = scmp.ne.s32.totalorder %s50, %s52
      %p56 = scmp.eq.s32.totalorder %s16, 0
      %p57 = por %p55, %p56
      %p58 = scmp.ne.s32.totalorder %s50, %s52
      %p59 = scmp.eq.s32.totalorder %s21, 1
      %p60 = por %p58, %p59
      %p61 = scmp.ne.s32.totalorder %s52, %s53
      %p62 = scmp.eq.s32.totalorder %s21, 0
      %p63 = por %p61, %p62
      %p64 = scmp.ne.s32.totalorder %s52, %s53
      %p65 = scmp.eq.s32.totalorder %s22, 1
      %p66 = por %p64, %p65
      %p68 = scmp.ne.s32.totalorder %s53, %s67
      %p69 = scmp.eq.s32.totalorder %s22, 0
      %p70 = por %p68, %p69
      %s72 = sadd.s32 %s71, 1
      %p75 = scmp.eq.s32.totalorder %s16, 1
      %p76 = scmp.ne.s32.totalorder %s71, %s73
      %p77 = scmp.eq.s32.totalorder %s16, 0
      %p78 = por %p76, %p77
      %p79 = scmp.ne.s32.totalorder %s71, %s73
      %p80 = scmp.eq.s32.totalorder %s21, 1
      %p81 = por %p79, %p80
      %p82 = scmp.ne.s32.totalorder %s73, %s74
      %p83 = scmp.eq.s32.totalorder %s21, 0
      %p84 = por %p82, %p83
      %p85 = scmp.ne.s32.totalorder %s73, %s74
      %p86 = scmp.eq.s32.totalorder %s22, 1
      %p87 = por %p85, %p86
      %p89 = scmp.ne.s32.totalorder %s74, %s88
      %p90 = scmp.eq.s32.totalorder %s22, 0
      %p91 = por %p89, %p90
      %s92 = ssub.s32 %s16, %s23
      %p93 = scmp.eq.s32.totalorder %s92, 0
      %s95 = sadd.s32 %s94, 1
      %s96 = scalar_select %p93, %s94, %s95
      %p99 = pneg %p93
      %p100 = scmp.eq.s32.totalorder %s16, 1
      %p101 = por %p99, %p100
      %p102 = scmp.ne.s32.totalorder %s94, %s97
      %p103 = scmp.eq.s32.totalorder %s16, 0
      %p104 = por %p102, %p103
      %p105 = scmp.ne.s32.totalorder %s94, %s97
      %p106 = scmp.eq.s32.totalorder %s21, 1
      %p107 = por %p105, %p106
      %p108 = scmp.ne.s32.totalorder %s97, %s98
      %p109 = scmp.eq.s32.totalorder %s21, 0
      %p110 = por %p108, %p109
      %p111 = scmp.ne.s32.totalorder %s97, %s98
      %p112 = scmp.eq.s32.totalorder %s22, 1
      %p113 = por %p111, %p112
      %p115 = scmp.ne.s32.totalorder %s98, %s114
      %p116 = scmp.eq.s32.totalorder %s22, 0
      %p117 = por %p115, %p116
      %p118 = scmp.le.s32.totalorder 1, %s16
      %p119 = scmp.lt.s32.totalorder %s16, 3
      %p120 = pnand %p118, %p119
      %p121 = pneg %p120
      // Predicated region
      $region9: #{tpu_custom_call.1} parent=5 // pred_check
        _
      $region10: #{tpu_custom_call.1} parent=5 // pred_check_branch
        %123 = sbr.rel (%p120) target = $region12
      $region11: #{tpu_custom_call.1} parent=5 // pred_region
        %s124 = ssub.s32 %s16, 1
        // Predicated region
        $region13: #{tpu_custom_call.1} parent=11 // pred_check
          %p125 = pneg %p63
        $region14: #{tpu_custom_call.1} parent=11 // pred_check_branch
          %127 = sbr.rel (%p125) target = $region16
        $region15: #{tpu_custom_call.1} parent=11 // pred_region
          %s129 = ssub.s32 1024, 1024
          %130 = vsyncadd [#allocation6], %s129
          %s131 = sshll.u32 [#allocation5], 4
          %s132 = int_to_ptr.vmem [resolvable:$true] %s131
          %137 = dma.hbm_to_vmem [thread:$0]  %s1, 1024, %s132, [#allocation6], 64, 64, 4
        $region16: #{tpu_custom_call.1} parent=11 // pred_fallthru
          _
        // Predicated region
        $region17: #{tpu_custom_call.1} parent=11 // pred_check
          %p138 = pneg %p84
        $region18: #{tpu_custom_call.1} parent=11 // pred_check_branch
          %140 = sbr.rel (%p138) target = $region20
        $region19: #{tpu_custom_call.1} parent=11 // pred_region
          _
        $region20: #{tpu_custom_call.1} parent=11 // pred_fallthru
          _
      $region12: #{tpu_custom_call.1} parent=5 // pred_fallthru
        _
      %p141 = scmp.lt.s32.totalorder %s16, 2
      // Predicated region
      $region21: #{tpu_custom_call.1} parent=5 // pred_check
        %p142 = pneg %p141
      $region22: #{tpu_custom_call.1} parent=5 // pred_check_branch
        %144 = sbr.rel (%p142) target = $region24
      $region23: #{tpu_custom_call.1} parent=5 // pred_region
        // Predicated region
        $region25: #{tpu_custom_call.1} parent=23 // pred_check
          %p145 = pneg %p36
        $region26: #{tpu_custom_call.1} parent=23 // pred_check_branch
          %147 = sbr.rel (%p145) target = $region28
        $region27: #{tpu_custom_call.1} parent=23 // pred_region
          %s148 = sand.u32 %s26, 1
          %s149 = scalar_lea.sflag [#allocation3], %s148
          %s150 = sand.u32 %s26, 1
          %s151 = smul.addr %s150, 8
          %s152 = scalar_lea.vmem [#allocation2], %s151
          %s154 = ssub.s32 128, 128
          %155 = vsyncadd %s149, %s154
          %s156 = smul.addr %s16, 128
          %s157 = scalar_lea.hbm %s0, %s156
          %s159 = sshll.u32 %s152, 4
          %s160 = int_to_ptr.vmem [resolvable:$true] %s159
          %162 = dma.hbm_to_vmem [thread:$0]  %s157, 128, %s160, %s149
        $region28: #{tpu_custom_call.1} parent=23 // pred_fallthru
          _
      $region24: #{tpu_custom_call.1} parent=5 // pred_fallthru
        _
      %p163 = scmp.le.s32.totalorder 1, %s16
      %p164 = scmp.lt.s32.totalorder %s16, 3
      %p165 = pnand %p163, %p164
      %p166 = pneg %p165
      // Predicated region
      $region29: #{tpu_custom_call.1} parent=5 // pred_check
        _
      $region30: #{tpu_custom_call.1} parent=5 // pred_check_branch
        %168 = sbr.rel (%p165) target = $region32
      $region31: #{tpu_custom_call.1} parent=5 // pred_region
        %s169 = ssub.s32 %s16, 1
        %s170 = sand.u32 %s29, 1
        %s171 = scalar_lea.sflag [#allocation3], %s170
        %s172 = sand.u32 %s29, 1
        %s173 = smul.addr %s172, 8
        %s174 = scalar_lea.vmem [#allocation2], %s173
        // Predicated region
        $region33: #{tpu_custom_call.1} parent=31 // pred_check
          %p175 = pneg %p42
        $region34: #{tpu_custom_call.1} parent=31 // pred_check_branch
          %177 = sbr.rel (%p175) target = $region36
        $region35: #{tpu_custom_call.1} parent=31 // pred_region
          %178 = dma.done %s171, 128
        $region36: #{tpu_custom_call.1} parent=31 // pred_fallthru
          _
        // Predicated region
        $region37: #{tpu_custom_call.1} parent=31 // pred_check
          %p179 = pneg %p63
        $region38: #{tpu_custom_call.1} parent=31 // pred_check_branch
          %181 = sbr.rel (%p179) target = $region40
        $region39: #{tpu_custom_call.1} parent=31 // pred_region
          %182 = dma.done [#allocation6], 1024
        $region40: #{tpu_custom_call.1} parent=31 // pred_fallthru
          _
        %s183 = sand.u32 %s29, 1
        %s184 = scalar_lea.sflag [#allocation3], %s183
        %s185 = sand.u32 %s29, 1
        %s186 = smul.addr %s185, 8
        %s187 = scalar_lea.vmem [#allocation2], %s186
        %p188 = pneg %p42
        %p189 = pneg %p39
        %p190 = pneg %p63
        %p191 = pneg %p60
        %p192 = pneg %p84
        %p193 = pneg %p81
        %p194 = pneg %p110
        %p195 = pneg %p107
        %s196 = sand.u32 %s97, 1
        %s197 = scalar_lea.sflag [#allocation4], %s196
        %s198 = sand.u32 %s97, 1
        %s199 = smul.addr %s198, 8
        %s200 = scalar_lea.vmem [#allocation7], %s199
        %v202 = vld [vmem:[%s174] sm:$0xff]
        %v203 = vpack.c.bf16 %v202, %v202
        %v204 = vld [vmem:[#allocation5] sm:$0xf]
        %v205 = vld [vmem:[#allocation5 + $0x4] sm:$0xf]
        %v206 = vld [vmem:[#allocation5 + $0x8] sm:$0xf]
        %v207 = vld [vmem:[#allocation5 + $0xc] sm:$0xf]
        %v208 = vld [vmem:[#allocation5 + $0x10] sm:$0xf]
        %v209 = vld [vmem:[#allocation5 + $0x14] sm:$0xf]
        %v210 = vld [vmem:[#allocation5 + $0x18] sm:$0xf]
        %v211 = vld [vmem:[#allocation5 + $0x1c] sm:$0xf]
        %v212 = vld [vmem:[#allocation5 + $0x20] sm:$0xf]
        %v213 = vld [vmem:[#allocation5 + $0x24] sm:$0xf]
        %v214 = vld [vmem:[#allocation5 + $0x28] sm:$0xf]
        %v215 = vld [vmem:[#allocation5 + $0x2c] sm:$0xf]
        %v216 = vld [vmem:[#allocation5 + $0x30] sm:$0xf]
        %v217 = vld [vmem:[#allocation5 + $0x34] sm:$0xf]
        %v218 = vld [vmem:[#allocation5 + $0x38] sm:$0xf]
        %v219 = vld [vmem:[#allocation5 + $0x3c] sm:$0xf]
        %v220 = vld [vmem:[%s2] sm:$0x1]
        %v222 = vlaneseq
        %v223 = vshrl.u32 %v222, 7
        %v224 = vsub.s32 0, %v223
        %v225 = vrot.slane %v220, %v224
        %v243 = vunpack.c.l.b16 %v204
        %v244 = vunpack.c.l.b16 %v205
        %v245 = vunpack.c.l.b16 %v206
        %v246 = vunpack.c.l.b16 %v207
        %v247 = vunpack.c.l.b16 %v208
        %v248 = vunpack.c.l.b16 %v209
        %v249 = vunpack.c.l.b16 %v210
        %v250 = vunpack.c.l.b16 %v211
        %v251 = vunpack.c.l.b16 %v212
        %v252 = vunpack.c.l.b16 %v213
        %v253 = vunpack.c.l.b16 %v214
        %v254 = vunpack.c.l.b16 %v215
        %v255 = vunpack.c.l.b16 %v216
        %v256 = vunpack.c.l.b16 %v217
        %v257 = vunpack.c.l.b16 %v218
        %v258 = vunpack.c.l.b16 %v219
        %v259 = vpack.c.b16 %v244, %v243
        %v260 = vpack.c.b16 %v246, %v245
        %v261 = vpack.c.b16 %v248, %v247
        %v262 = vpack.c.b16 %v250, %v249
        %v263 = vpack.c.b16 %v252, %v251
        %v264 = vpack.c.b16 %v254, %v253
        %v265 = vpack.c.b16 %v256, %v255
        %v266 = vpack.c.b16 %v258, %v257
        %275 = vmatprep.subr.bf16.mxu0 0
        %276 = vmatpush1.bf16.msra.mxu0 %v266
        %277 = vmatprep.subr.bf16.mxu0 0
        %278 = vmatpush1.bf16.msra.mxu0 %v265
        %279 = vmatprep.subr.bf16.mxu0 0
        %280 = vmatpush1.bf16.msra.mxu0 %v264
        %281 = vmatprep.subr.bf16.mxu0 0
        %282 = vmatpush1.bf16.msra.mxu0 %v263
        %283 = vmatprep.subr.bf16.mxu0 0
        %284 = vmatpush1.bf16.msra.mxu0 %v262
        %285 = vmatprep.subr.bf16.mxu0 0
        %286 = vmatpush1.bf16.msra.mxu0 %v261
        %287 = vmatprep.subr.bf16.mxu0 0
        %288 = vmatpush1.bf16.msra.mxu0 %v260
        %289 = vmatprep.subr.bf16.mxu0 0
        %290 = vmatpush1.bf16.msra.mxu0 %v259
        %291 = vmatprep.subr.bf16.mxu0 0
        %292 = vmatpush2.bf16.msra.mxu0 0
        %293 = vmatprep.subr.bf16.mxu0 0
        %294 = vmatpush2.bf16.msra.mxu0 0
        %295 = vmatprep.subr.bf16.mxu0 0
        %296 = vmatpush2.bf16.msra.mxu0 0
        %297 = vmatprep.subr.bf16.mxu0 0
        %298 = vmatpush2.bf16.msra.mxu0 0
        %299 = vmatprep.subr.bf16.mxu0 0
        %300 = vmatpush2.bf16.msra.mxu0 0
        %301 = vmatprep.subr.bf16.mxu0 0
        %302 = vmatpush2.bf16.msra.mxu0 0
        %303 = vmatprep.subr.bf16.mxu0 0
        %304 = vmatpush2.bf16.msra.mxu0 0
        %305 = vmatprep.subr.bf16.mxu0 0
        %306 = vmatpush2.bf16.msra.mxu0 0
        %307 = vmatprep.mubr.bf16.mxu0 0
        %308 = vmatmul.mubr.bf16.gmra.mxu0 %v203
        %v309 = vpop.f32.mrf.mxu0
        %v310 = vadd.f32 %v225, %v309
        %v311 = vpop.f32.mrf.mxu0
        %v312 = vpop.f32.mrf.mxu0
        %v313 = vpop.f32.mrf.mxu0
        %314 = vdwg.mxu0
        %315 = vst [vmem:[%s200] sm:$0xff] %v310
        %s316 = sand.u32 %s97, 1
        %s317 = scalar_lea.sflag [#allocation4], %s316
        %s318 = sand.u32 %s97, 1
        %s319 = smul.addr %s318, 8
        %s320 = scalar_lea.vmem [#allocation7], %s319
        // Predicated region
        $region41: #{tpu_custom_call.1} parent=31 // pred_check
          %p321 = pneg %p107
        $region42: #{tpu_custom_call.1} parent=31 // pred_check_branch
          %323 = sbr.rel (%p321) target = $region44
        $region43: #{tpu_custom_call.1} parent=31 // pred_region
          %s325 = ssub.s32 128, 128
          %326 = vsyncadd %s317, %s325
          %s327 = smul.addr %s21, 128
          %s328 = scalar_lea.hbm %s3, %s327
          %s330 = sshll.u32 %s320, 4
          %s331 = int_to_ptr.vmem [resolvable:$true] %s330
          %333 = dma.vmem_to_hbm [thread:$0]  %s331, 128, %s328, %s317
        $region44: #{tpu_custom_call.1} parent=31 // pred_fallthru
          _
      $region32: #{tpu_custom_call.1} parent=5 // pred_fallthru
        _
      %p334 = scmp.le.s32.totalorder 2, %s16
      // Predicated region
      $region45: #{tpu_custom_call.1} parent=5 // pred_check
        %p335 = pneg %p334
      $region46: #{tpu_custom_call.1} parent=5 // pred_check_branch
        %337 = sbr.rel (%p335) target = $region48
      $region47: #{tpu_custom_call.1} parent=5 // pred_region
        %s338 = ssub.s32 %s16, 2
        // Predicated region
        $region49: #{tpu_custom_call.1} parent=47 // pred_check
          %p339 = pneg %p113
        $region50: #{tpu_custom_call.1} parent=47 // pred_check_branch
          %341 = sbr.rel (%p339) target = $region52
        $region51: #{tpu_custom_call.1} parent=47 // pred_region
          %s342 = sand.u32 %s98, 1
          %s343 = scalar_lea.sflag [#allocation4], %s342
          %s344 = sand.u32 %s98, 1
          %s345 = smul.addr %s344, 8
          %s346 = scalar_lea.vmem [#allocation7], %s345
          %347 = dma.done %s343, 128
        $region52: #{tpu_custom_call.1} parent=47 // pred_fallthru
          _
      $region48: #{tpu_custom_call.1} parent=5 // pred_fallthru
        _
    $region6: #{tpu_custom_call.1} parent=1 // loop_footer
      %s20 = sadd.s32 1, %s16
    $region7: #{tpu_custom_call.1} parent=1 // loop_footer_branch
      %15 = sbr.rel target = $region3
    $region8: #{tpu_custom_call.1} parent=1 // loop_exit
      _
    %348 = vsyncpa [#allocation3], 1
    %s349 = scalar_lea.sflag [#allocation3], 1
    %350 = vsyncpa %s349, 1
    %351 = vsyncpa [#allocation6], 1
    %352 = vsyncpa [#allocation4], 1
    %s353 = scalar_lea.sflag [#allocation4], 1
    %354 = vsyncpa %s353, 1

</llo_original>
